<compile_context>
chip_gen: v7x
topology: tpu7x:2x2x1
jax: 0.10.0
libtpu: 0.0.40
codegen_flags: <defaults>
</compile_context>

<pallas_src>
import functools

import jax
import jax.numpy as jnp
from jax.experimental import pallas as pl
from jax.experimental.pallas import tpu as pltpu


# ---------------------------------------------------------------------------
# Kernels
# ---------------------------------------------------------------------------
def _expert_kernel_resident(x_ref, wg_ref, wu_ref, wd_ref, o_ref):
    """Whole weight matrices resident in VMEM; 1-D grid over token tiles."""
    x = x_ref[...]                                                # (TM, H)
    gate = jnp.dot(x, wg_ref[...], preferred_element_type=jnp.float32)
    up = jnp.dot(x, wu_ref[...], preferred_element_type=jnp.float32)
    # SiLU in f32 (sigmoid -> EUP, muls -> VPU), back to weight dtype for MXU.
    h = (gate * jax.nn.sigmoid(gate) * up).astype(wd_ref.dtype)  # (TM, I)
    o_ref[...] = jnp.dot(h, wd_ref[...],
                         preferred_element_type=jnp.float32).astype(o_ref.dtype)


def _expert_kernel_slab(x_ref, wg_ref, wu_ref, wd_ref, o_ref, acc_ref):
    """Grid (token_tiles, intermediate_slabs); f32 accumulator over slabs."""
    i = pl.program_id(1)

    x = x_ref[...]                                                # (TM, H)
    gate = jnp.dot(x, wg_ref[...], preferred_element_type=jnp.float32)
    up = jnp.dot(x, wu_ref[...], preferred_element_type=jnp.float32)
    h = (gate * jax.nn.sigmoid(gate) * up).astype(wd_ref.dtype)  # (TM, TI)
    contrib = jnp.dot(h, wd_ref[...], preferred_element_type=jnp.float32)

    # First-iteration direct store instead of zero-init + accumulate:
    # saves one full (TM, H) f32 vector-store pass per token tile.
    @pl.when(i == 0)
    def _():
        acc_ref[...] = contrib

    @pl.when(i > 0)
    def _():
        acc_ref[...] += contrib

    @pl.when(i == pl.num_programs(1) - 1)
    def _():
        o_ref[...] = acc_ref[...].astype(o_ref.dtype)


# ---------------------------------------------------------------------------
# Wrapper
# ---------------------------------------------------------------------------
def _round_up(a, b):
    return (a + b - 1) // b * b


def _vmem_capacity_bytes():
    """Per-core VMEM capacity; conservative 64 MiB (v7x) if query fails."""
    try:
        cap = int(getattr(pltpu.get_tpu_info(), "vmem_capacity_bytes", 0) or 0)
        if cap > 0:
            return cap
    except Exception:
        pass
    return 64 << 20


@functools.partial(
    jax.jit,
    static_argnames=("block_tokens", "block_inter", "compute_dtype",
                     "allow_weight_resident"))
def expert_forward(x, wg_t, wu_t, wd_t, *, block_tokens=None, block_inter=None,
                   compute_dtype=None, allow_weight_resident=True):
    """x: (..., H); wg_t, wu_t: (H, I); wd_t: (I, H).

    compute_dtype: optional dtype (e.g. jnp.bfloat16) to cast MXU operands to;
    accumulation stays f32 and the output keeps x's original dtype.
    """
    orig_shape = x.shape
    out_dtype = x.dtype
    H = orig_shape[-1]
    I = wg_t.shape[1]

    if compute_dtype is not None:
        x = x.astype(compute_dtype)
        wg_t = wg_t.astype(compute_dtype)
        wu_t = wu_t.astype(compute_dtype)
        wd_t = wd_t.astype(compute_dtype)

    x2d = x.reshape(-1, H)
    T = x2d.shape[0]

    wb = jnp.dtype(wg_t.dtype).itemsize
    xb = jnp.dtype(x.dtype).itemsize
    ob = jnp.dtype(out_dtype).itemsize

    vmem_cap = _vmem_capacity_bytes()
    vmem_budget = vmem_cap - (8 << 20)   # headroom for compiler scratch / sems

    # ---- token tiling (pad instead of asserting divisibility) ----
    if block_tokens is None:
        block_tokens = 512               # amortize weight streaming on v6e/v7x
    assert block_tokens % 8 == 0, "block_tokens must be a multiple of 8"
    TM = min(block_tokens, _round_up(T, 8))
    T_pad = _round_up(T, TM)

    # ---- weight-resident fast path: all weights fit VMEM ----
    est_resident = (2 * 3 * H * I * wb            # 3 weight mats (2x buffers)
                    + 2 * TM * H * xb             # x tile, double-buffered
                    + 2 * TM * H * ob             # out tile, double-buffered
                    + 3 * TM * I * 4)             # f32 gate/up/h intermediates
    use_resident = allow_weight_resident and est_resident <= vmem_budget

    if use_resident:
        if T_pad != T:
            x2d = jnp.pad(x2d, ((0, T_pad - T), (0, 0)))
        vmem_limit = int(min(max(est_resident + (4 << 20), 32 << 20),
                             vmem_budget))
        out = pl.pallas_call(
            _expert_kernel_resident,
            out_shape=jax.ShapeDtypeStruct((T_pad, H), out_dtype),
            grid_spec=pltpu.PrefetchScalarGridSpec(
                num_scalar_prefetch=0,
                grid=(T_pad // TM,),
                in_specs=[
                    pl.BlockSpec((TM, H), lambda t: (t, 0)),   # x tile
                    pl.BlockSpec((H, I), lambda t: (0, 0)),    # Wg^T resident
                    pl.BlockSpec((H, I), lambda t: (0, 0)),    # Wu^T resident
                    pl.BlockSpec((I, H), lambda t: (0, 0)),    # Wd^T resident
                ],
                out_specs=pl.BlockSpec((TM, H), lambda t: (t, 0)),
            ),
            compiler_params=pltpu.CompilerParams(
                dimension_semantics=("parallel",),
                vmem_limit_bytes=vmem_limit),
        )(x2d, wg_t, wu_t, wd_t)
    else:
        # ---- multi-slab path: stream intermediate-dim slabs, accumulate ----
        if block_inter is None:
            # 64 MiB/TC parts (v7x) get narrower slabs than 128 MiB parts.
            block_inter = 512 if vmem_cap > (96 << 20) else 256
        assert block_inter % 128 == 0, "block_inter must be a multiple of 128"

        TI = min(block_inter, _round_up(I, 128))

        def _slab_est(ti):
            return (2 * 2 * H * ti * wb           # Wg + Wu slabs, dbl-buffered
                    + 2 * ti * H * wb             # Wd slab, dbl-buffered
                    + 2 * TM * H * xb             # x tile
                    + 2 * TM * H * ob             # out tile
                    + TM * H * 4                  # f32 accumulator scratch
                    + 3 * TM * ti * 4)            # f32 gate/up/h intermediates

        while TI > 128 and _slab_est(TI) > vmem_budget:
            TI = _round_up(TI // 2, 128)

        I_pad = _round_up(I, TI)
        n_i = I_pad // TI

        if T_pad != T:
            x2d = jnp.pad(x2d, ((0, T_pad - T), (0, 0)))
        # TODO(synk): in production, pre-pad the weights once at model-load
        # time instead of per forward call (exact either way: padded gate/up
        # columns are zero, so SiLU(0)*0 contributes nothing).
        if I_pad != I:
            wg_t = jnp.pad(wg_t, ((0, 0), (0, I_pad - I)))
            wu_t = jnp.pad(wu_t, ((0, 0), (0, I_pad - I)))
            wd_t = jnp.pad(wd_t, ((0, I_pad - I), (0, 0)))

        vmem_limit = int(min(max(_slab_est(TI) + (4 << 20), 32 << 20),
                             vmem_budget))
        out = pl.pallas_call(
            _expert_kernel_slab,
            out_shape=jax.ShapeDtypeStruct((T_pad, H), out_dtype),
            grid_spec=pltpu.PrefetchScalarGridSpec(
                num_scalar_prefetch=0,
                grid=(T_pad // TM, n_i),
                in_specs=[
                    pl.BlockSpec((TM, H), lambda t, i: (t, 0)),   # x tile
                    pl.BlockSpec((H, TI), lambda t, i: (0, i)),   # Wg^T slab
                    pl.BlockSpec((H, TI), lambda t, i: (0, i)),   # Wu^T slab
                    pl.BlockSpec((TI, H), lambda t, i: (i, 0)),   # Wd^T slab
                ],
                out_specs=pl.BlockSpec((TM, H), lambda t, i: (t, 0)),
                scratch_shapes=[pltpu.VMEM((TM, H), jnp.float32)],
            ),
            compiler_params=pltpu.CompilerParams(
                dimension_semantics=("parallel", "arbitrary"),
                vmem_limit_bytes=vmem_limit),
        )(x2d, wg_t, wu_t, wd_t)

    if T_pad != T:
        out = out[:T]
    return out.reshape(orig_shape)


# ---------------------------------------------------------------------------
# Reference + demo
# ---------------------------------------------------------------------------
def _reference(x, wg_t, wu_t, wd_t):
    gate = x @ wg_t
    up = x @ wu_t
    return (jax.nn.silu(gate) * up) @ wd_t


if __name__ == "__main__":
    hidden_size = 64
    intermediate_size = 256
    batch, seq = 2, 8

    key = jax.random.PRNGKey(0)
    kx, kg, ku, kd = jax.random.split(key, 4)

    # Deterministic parameter init (PyTorch Linear-like uniform bounds),
    # stored already transposed relative to torch's (out, in) weight layout.
    bound_h = 1.0 / (hidden_size ** 0.5)
    bound_i = 1.0 / (intermediate_size ** 0.5)
    wg_t = jax.random.uniform(kg, (hidden_size, intermediate_size),
                              jnp.float32, -bound_h, bound_h)   # gate_proj.weight^T
    wu_t = jax.random.uniform(ku, (hidden_size, intermediate_size),
                              jnp.float32, -bound_h, bound_h)   # up_proj.weight^T
    wd_t = jax.random.uniform(kd, (intermediate_size, hidden_size),
                              jnp.float32, -bound_i, bound_i)   # down_proj.weight^T

    x = jax.random.normal(kx, (batch, seq, hidden_size), jnp.float32)
    y_ref = _reference(x, wg_t, wu_t, wd_t)

    # 1) Default path (weights resident in VMEM at this size), f32 operands.
    y = jax.block_until_ready(expert_forward(x, wg_t, wu_t, wd_t))
    assert y.shape == x.shape
    assert jnp.allclose(y, y_ref, atol=2e-3, rtol=2e-3), "resident path mismatch"

    # 2) Multi-slab accumulator path (forced), exercising the reduction grid.
    y2 = jax.block_until_ready(
        expert_forward(x, wg_t, wu_t, wd_t,
                       allow_weight_resident=False, block_inter=128))
    assert jnp.allclose(y2, y_ref, atol=2e-3, rtol=2e-3), "slab path mismatch"

    # 3) bf16 MXU-operand path (f32 accumulation), looser tolerance.
    y3 = jax.block_until_ready(
        expert_forward(x, wg_t, wu_t, wd_t, compute_dtype=jnp.bfloat16))
    assert y3.dtype == x.dtype
    assert jnp.allclose(y3, y_ref, atol=1e-1, rtol=1e-1), "bf16 path mismatch"

    print("KERNEL_OK")
</pallas_src>

<mosaic_0001>
module attributes {stable_mosaic.version = 11 : i64} {
  func.func @_expert_kernel_resident(%arg0: i32, %arg1: memref<16x64xf32, #tpu.memory_space<vmem>>, %arg2: memref<64x256xf32, #tpu.memory_space<vmem>>, %arg3: memref<64x256xf32, #tpu.memory_space<vmem>>, %arg4: memref<256x64xf32, #tpu.memory_space<vmem>>, %arg5: memref<16x64xf32, #tpu.memory_space<vmem>>) attributes {dimension_semantics = [#tpu.dimension_semantics<parallel>], iteration_bounds = array<i64: 1>, scalar_prefetch = 0 : i64, scratch_operands = 0 : i64, tpu.core_type = #tpu.core_type<tc>, window_params = [{transform_indices = @transform_0, window_bounds = array<i64: 16, 64>}, {pipeline_mode = #tpu.pipeline_mode<synchronous>, transform_indices = @transform_1, window_bounds = array<i64: 64, 256>}, {pipeline_mode = #tpu.pipeline_mode<synchronous>, transform_indices = @transform_2, window_bounds = array<i64: 64, 256>}, {pipeline_mode = #tpu.pipeline_mode<synchronous>, transform_indices = @transform_3, window_bounds = array<i64: 256, 64>}, {transform_indices = @transform_4, window_bounds = array<i64: 16, 64>}]} {
    %c0 = arith.constant 0 : index
    %c0_0 = arith.constant 0 : index
    %0 = vector.load %arg1[%c0, %c0_0] : memref<16x64xf32, #tpu.memory_space<vmem>>, vector<16x64xf32>
    %c0_1 = arith.constant 0 : index
    %c0_2 = arith.constant 0 : index
    %1 = vector.load %arg2[%c0_1, %c0_2] : memref<64x256xf32, #tpu.memory_space<vmem>>, vector<64x256xf32>
    %cst = arith.constant dense<0.000000e+00> : vector<16x256xf32>
    %2 = tpu.matmul %0, %1, %cst {dimension_numbers = #tpu.dot_dimension_numbers<[1], [0], [0], [1], [0, 0, 1, 1], [], []>} : vector<16x64xf32>, vector<64x256xf32>, vector<16x256xf32> -> vector<16x256xf32>
    %c0_3 = arith.constant 0 : index
    %c0_4 = arith.constant 0 : index
    %3 = vector.load %arg3[%c0_3, %c0_4] : memref<64x256xf32, #tpu.memory_space<vmem>>, vector<64x256xf32>
    %cst_5 = arith.constant dense<0.000000e+00> : vector<16x256xf32>
    %4 = tpu.matmul %0, %3, %cst_5 {dimension_numbers = #tpu.dot_dimension_numbers<[1], [0], [0], [1], [0, 0, 1, 1], [], []>} : vector<16x64xf32>, vector<64x256xf32>, vector<16x256xf32> -> vector<16x256xf32>
    %5 = arith.negf %2 : vector<16x256xf32>
    %6 = math.exp %5 : vector<16x256xf32>
    %cst_6 = arith.constant 1.000000e+00 : f32
    %7 = vector.broadcast %cst_6 : f32 to vector<16x256xf32>
    %8 = arith.addf %7, %6 : vector<16x256xf32>
    %9 = arith.divf %7, %8 : vector<16x256xf32>
    %10 = arith.mulf %2, %9 : vector<16x256xf32>
    %11 = arith.mulf %10, %4 : vector<16x256xf32>
    %c0_7 = arith.constant 0 : index
    %c0_8 = arith.constant 0 : index
    %12 = vector.load %arg4[%c0_7, %c0_8] : memref<256x64xf32, #tpu.memory_space<vmem>>, vector<256x64xf32>
    %cst_9 = arith.constant dense<0.000000e+00> : vector<16x64xf32>
    %13 = tpu.matmul %11, %12, %cst_9 {dimension_numbers = #tpu.dot_dimension_numbers<[1], [0], [0], [1], [0, 0, 1, 1], [], []>} : vector<16x256xf32>, vector<256x64xf32>, vector<16x64xf32> -> vector<16x64xf32>
    %c0_10 = arith.constant 0 : index
    %c0_11 = arith.constant 0 : index
    %14 = vector.load %arg5[%c0_10, %c0_11] : memref<16x64xf32, #tpu.memory_space<vmem>>, vector<16x64xf32>
    tpu.vector_store %arg5[%c0_10, %c0_11], %13 {strides = array<i32>} : memref<16x64xf32, #tpu.memory_space<vmem>>, vector<16x64xf32>,
    return
  }
  func.func @transform_0(%arg0: i32) -> (i32, i32) {
    %c0_i32 = arith.constant 0 : i32
    %c0_i32_0 = arith.constant 0 : i32
    return %arg0, %c0_i32 : i32, i32
  }
  func.func @transform_1(%arg0: i32) -> (i32, i32) {
    %c0_i32 = arith.constant 0 : i32
    %c0_i32_0 = arith.constant 0 : i32
    %c0_i32_1 = arith.constant 0 : i32
    return %c0_i32, %c0_i32_0 : i32, i32
  }
  func.func @transform_2(%arg0: i32) -> (i32, i32) {
    %c0_i32 = arith.constant 0 : i32
    %c0_i32_0 = arith.constant 0 : i32
    %c0_i32_1 = arith.constant 0 : i32
    return %c0_i32, %c0_i32_0 : i32, i32
  }
  func.func @transform_3(%arg0: i32) -> (i32, i32) {
    %c0_i32 = arith.constant 0 : i32
    %c0_i32_0 = arith.constant 0 : i32
    %c0_i32_1 = arith.constant 0 : i32
    return %c0_i32, %c0_i32_0 : i32, i32
  }
  func.func @transform_4(%arg0: i32) -> (i32, i32) {
    %c0_i32 = arith.constant 0 : i32
    %c0_i32_0 = arith.constant 0 : i32
    return %arg0, %c0_i32 : i32, i32
  }
}

</mosaic_0001>

<llo_original>
// kernel: expert_forward.1
$region0: #{expert_forward.1}
  #allocation0 [shape = 'u32[]', space=smem, size = 0x4, offset = 0x4, fixed_abs, tag = 'smem constant byte address 0x4 - core index']
  #allocation1 [shape = 'u32[144,128]{1,0:T(1,128)}', space=vmem, size = 0x12000, scoped, tag = 'internal scratch']
  %s0 = inlined_call_operand.vmem [shape: f32[16,64], index: 0, kind: input, shape index: {}]
  %s1 = inlined_call_operand.vmem [shape: f32[64,256], index: 1, kind: input, shape index: {}]
  %s2 = inlined_call_operand.vmem [shape: f32[64,256], index: 2, kind: input, shape index: {}]
  %s3 = inlined_call_operand.vmem [shape: f32[256,64], index: 3, kind: input, shape index: {}]
  %s4 = inlined_call_operand.hbm [shape: f32[16,64], index: 4, kind: output, shape index: {}]
  %s5 = sld [smem:[#allocation0]]
  $region26: #{expert_forward.1} parent=0
    _
  %s7 = ssub.s32 1, %s5
  %s8 = scalar_select 0, %s7, %s5
  $region1: #{expert_forward.1} parent=0
    #allocation2 [shape = 'u8[8192]{0}', space=vmem, size = 0x2000, scoped, tag = 'output window, operand 0, single buffered']
    #allocation3 [shape = 's32[1]{0}', space=sflag, size = 0x4, scoped, tag = 'scoped memory for expert_forward.1']
    %9 = vsyncpa [#allocation3], 0
    // Predicated region
    $region2: #{expert_forward.1} parent=1 // pred_check
      _
    $region3: #{expert_forward.1} parent=1 // pred_check_branch
      %11 = sbr.rel (0) target = $region5
    $region4: #{expert_forward.1} parent=1 // pred_region
      _
    $region5: #{expert_forward.1} parent=1 // pred_fallthru
      _
    // Predicated region
    $region6: #{expert_forward.1} parent=1 // pred_check
      _
    $region7: #{expert_forward.1} parent=1 // pred_check_branch
      %13 = sbr.rel (0) target = $region9
    $region8: #{expert_forward.1} parent=1 // pred_region
      _
    $region9: #{expert_forward.1} parent=1 // pred_fallthru
      _
    // Predicated region
    $region10: #{expert_forward.1} parent=1 // pred_check
      _
    $region11: #{expert_forward.1} parent=1 // pred_check_branch
      %15 = sbr.rel (0) target = $region13
    $region12: #{expert_forward.1} parent=1 // pred_region
      _
    $region13: #{expert_forward.1} parent=1 // pred_fallthru
      _
    // Predicated region
    $region14: #{expert_forward.1} parent=1 // pred_check
      _
    $region15: #{expert_forward.1} parent=1 // pred_check_branch
      %17 = sbr.rel (0) target = $region17
    $region16: #{expert_forward.1} parent=1 // pred_region
      _
    $region17: #{expert_forward.1} parent=1 // pred_fallthru
      _
    %v18 = vld [vmem:[%s0] sm:$0xff]
    %v19 = vld [vmem:[%s0 + $0x8] sm:$0xff]
    %v20 = vld [vmem:[%s1] sm:$0xff]
    %v21 = vld [vmem:[%s1 + $0x8] sm:$0xff]
    %v22 = vld [vmem:[%s1 + $0x10] sm:$0xff]
    %v23 = vld [vmem:[%s1 + $0x18] sm:$0xff]
    %v24 = vld [vmem:[%s1 + $0x20] sm:$0xff]
    %v25 = vld [vmem:[%s1 + $0x28] sm:$0xff]
    %v26 = vld [vmem:[%s1 + $0x30] sm:$0xff]
    %v27 = vld [vmem:[%s1 + $0x38] sm:$0xff]
    %v28 = vld [vmem:[%s1 + $0x40] sm:$0xff]
    %v29 = vld [vmem:[%s1 + $0x48] sm:$0xff]
    %v30 = vld [vmem:[%s1 + $0x50] sm:$0xff]
    %v31 = vld [vmem:[%s1 + $0x58] sm:$0xff]
    %v32 = vld [vmem:[%s1 + $0x60] sm:$0xff]
    %v33 = vld [vmem:[%s1 + $0x68] sm:$0xff]
    %v34 = vld [vmem:[%s1 + $0x70] sm:$0xff]
    %v35 = vld [vmem:[%s1 + $0x78] sm:$0xff]
    %vm36 = vcmask 523264
    %v38 = vsel %vm36, %v18, 0
    %v41 = vsel %vm36, %v19, 0
    %43 = vmatprep.subr.mxu0 %v21
    %44 = vmatpush1.msra.mxu0 %v20
    %45 = vmatprep.subr.mxu0 %v23
    %46 = vmatpush1.msra.mxu0 %v22
    %47 = vmatprep.subr.mxu0 %v25
    %48 = vmatpush1.msra.mxu0 %v24
    %49 = vmatprep.subr.mxu0 %v27
    %50 = vmatpush1.msra.mxu0 %v26
    %51 = vmatprep.subr.mxu0 %v29
    %52 = vmatpush1.msra.mxu0 %v28
    %53 = vmatprep.subr.mxu0 %v31
    %54 = vmatpush1.msra.mxu0 %v30
    %55 = vmatprep.subr.mxu0 %v33
    %56 = vmatpush1.msra.mxu0 %v32
    %57 = vmatprep.subr.mxu0 %v35
    %58 = vmatpush1.msra.mxu0 %v34
    %59 = vmatprep.subr.mxu0 0.0
    %60 = vmatpush1.msra.mxu0 0.0
    %61 = vmatprep.subr.mxu0 0.0
    %62 = vmatpush1.msra.mxu0 0.0
    %63 = vmatprep.subr.mxu0 0.0
    %64 = vmatpush1.msra.mxu0 0.0
    %65 = vmatprep.subr.mxu0 0.0
    %66 = vmatpush1.msra.mxu0 0.0
    %67 = vmatprep.subr.mxu0 0.0
    %68 = vmatpush1.msra.mxu0 0.0
    %69 = vmatprep.subr.mxu0 0.0
    %70 = vmatpush1.msra.mxu0 0.0
    %71 = vmatprep.subr.mxu0 0.0
    %72 = vmatpush1.msra.mxu0 0.0
    %73 = vmatprep.subr.mxu0 0.0
    %74 = vmatpush1.msra.mxu0 0.0
    %75 = vmatprep.subr.mxu0 0.0
    %76 = vmatpush1.msra.mxu0 0.0
    %77 = vmatprep.subr.mxu0 0.0
    %78 = vmatpush1.msra.mxu0 0.0
    %79 = vmatprep.subr.mxu0 0.0
    %80 = vmatpush1.msra.mxu0 0.0
    %81 = vmatprep.subr.mxu0 0.0
    %82 = vmatpush1.msra.mxu0 0.0
    %83 = vmatprep.subr.mxu0 0.0
    %84 = vmatpush1.msra.mxu0 0.0
    %85 = vmatprep.subr.mxu0 0.0
    %86 = vmatpush1.msra.mxu0 0.0
    %87 = vmatprep.subr.mxu0 0.0
    %88 = vmatpush1.msra.mxu0 0.0
    %89 = vmatprep.subr.mxu0 0.0
    %90 = vmatpush1.msra.mxu0 0.0
    %91 = vmatprep.subr.mxu0 0.0
    %92 = vmatpush1.msra.mxu0 0.0
    %93 = vmatprep.subr.mxu0 0.0
    %94 = vmatpush1.msra.mxu0 0.0
    %95 = vmatprep.subr.mxu0 0.0
    %96 = vmatpush1.msra.mxu0 0.0
    %97 = vmatprep.subr.mxu0 0.0
    %98 = vmatpush1.msra.mxu0 0.0
    %99 = vmatprep.subr.mxu0 0.0
    %100 = vmatpush1.msra.mxu0 0.0
    %101 = vmatprep.subr.mxu0 0.0
    %102 = vmatpush1.msra.mxu0 0.0
    %103 = vmatprep.subr.mxu0 0.0
    %104 = vmatpush1.msra.mxu0 0.0
    %105 = vmatprep.subr.mxu0 0.0
    %106 = vmatpush1.msra.mxu0 0.0
    %107 = vmatprep.mubr.f32.mxu0 0.0
    %108 = vmatmul.mubr.f32.gmra.mrb[0].mxu0 %v38
    %v109 = vpop.f32.mrb[0].mxu0
    %v110 = vadd.f32 0.0, %v109
    %v111 = vpop.f32.mrb[0].mxu0
    %v112 = vadd.f32 0.0, %v111
    %113 = vmatprep.mubr.f32.mxu0 0.0
    %114 = vmatmul.mubr.f32.gmra.mrb[0].mxu0 %v41
    %v115 = vpop.f32.mrb[0].mxu0
    %v116 = vadd.f32 0.0, %v115
    %v117 = vpop.f32.mrb[0].mxu0
    %v118 = vadd.f32 0.0, %v117
    %119 = vdwg.mxu0
    %v120 = vld [vmem:[%s2] sm:$0xff]
    %v121 = vld [vmem:[%s2 + $0x8] sm:$0xff]
    %v122 = vld [vmem:[%s2 + $0x10] sm:$0xff]
    %v123 = vld [vmem:[%s2 + $0x18] sm:$0xff]
    %v124 = vld [vmem:[%s2 + $0x20] sm:$0xff]
    %v125 = vld [vmem:[%s2 + $0x28] sm:$0xff]
    %v126 = vld [vmem:[%s2 + $0x30] sm:$0xff]
    %v127 = vld [vmem:[%s2 + $0x38] sm:$0xff]
    %v128 = vld [vmem:[%s2 + $0x40] sm:$0xff]
    %v129 = vld [vmem:[%s2 + $0x48] sm:$0xff]
    %v130 = vld [vmem:[%s2 + $0x50] sm:$0xff]
    %v131 = vld [vmem:[%s2 + $0x58] sm:$0xff]
    %v132 = vld [vmem:[%s2 + $0x60] sm:$0xff]
    %v133 = vld [vmem:[%s2 + $0x68] sm:$0xff]
    %v134 = vld [vmem:[%s2 + $0x70] sm:$0xff]
    %v135 = vld [vmem:[%s2 + $0x78] sm:$0xff]
    %136 = vmatprep.subr.mxu0 %v121
    %137 = vmatpush1.msra.mxu0 %v120
    %138 = vmatprep.subr.mxu0 %v123
    %139 = vmatpush1.msra.mxu0 %v122
    %140 = vmatprep.subr.mxu0 %v125
    %141 = vmatpush1.msra.mxu0 %v124
    %142 = vmatprep.subr.mxu0 %v127
    %143 = vmatpush1.msra.mxu0 %v126
    %144 = vmatprep.subr.mxu0 %v129
    %145 = vmatpush1.msra.mxu0 %v128
    %146 = vmatprep.subr.mxu0 %v131
    %147 = vmatpush1.msra.mxu0 %v130
    %148 = vmatprep.subr.mxu0 %v133
    %149 = vmatpush1.msra.mxu0 %v132
    %150 = vmatprep.subr.mxu0 %v135
    %151 = vmatpush1.msra.mxu0 %v134
    %152 = vmatprep.subr.mxu0 0.0
    %153 = vmatpush1.msra.mxu0 0.0
    %154 = vmatprep.subr.mxu0 0.0
    %155 = vmatpush1.msra.mxu0 0.0
    %156 = vmatprep.subr.mxu0 0.0
    %157 = vmatpush1.msra.mxu0 0.0
    %158 = vmatprep.subr.mxu0 0.0
    %159 = vmatpush1.msra.mxu0 0.0
    %160 = vmatprep.subr.mxu0 0.0
    %161 = vmatpush1.msra.mxu0 0.0
    %162 = vmatprep.subr.mxu0 0.0
    %163 = vmatpush1.msra.mxu0 0.0
    %164 = vmatprep.subr.mxu0 0.0
    %165 = vmatpush1.msra.mxu0 0.0
    %166 = vmatprep.subr.mxu0 0.0
    %167 = vmatpush1.msra.mxu0 0.0
    %168 = vmatprep.subr.mxu0 0.0
    %169 = vmatpush1.msra.mxu0 0.0
    %170 = vmatprep.subr.mxu0 0.0
    %171 = vmatpush1.msra.mxu0 0.0
    %172 = vmatprep.subr.mxu0 0.0
    %173 = vmatpush1.msra.mxu0 0.0
    %174 = vmatprep.subr.mxu0 0.0
    %175 = vmatpush1.msra.mxu0 0.0
    %176 = vmatprep.subr.mxu0 0.0
    %177 = vmatpush1.msra.mxu0 0.0
    %178 = vmatprep.subr.mxu0 0.0
    %179 = vmatpush1.msra.mxu0 0.0
    %180 = vmatprep.subr.mxu0 0.0
    %181 = vmatpush1.msra.mxu0 0.0
    %182 = vmatprep.subr.mxu0 0.0
    %183 = vmatpush1.msra.mxu0 0.0
    %184 = vmatprep.subr.mxu0 0.0
    %185 = vmatpush1.msra.mxu0 0.0
    %186 = vmatprep.subr.mxu0 0.0
    %187 = vmatpush1.msra.mxu0 0.0
    %188 = vmatprep.subr.mxu0 0.0
    %189 = vmatpush1.msra.mxu0 0.0
    %190 = vmatprep.subr.mxu0 0.0
    %191 = vmatpush1.msra.mxu0 0.0
    %192 = vmatprep.subr.mxu0 0.0
    %193 = vmatpush1.msra.mxu0 0.0
    %194 = vmatprep.subr.mxu0 0.0
    %195 = vmatpush1.msra.mxu0 0.0
    %196 = vmatprep.subr.mxu0 0.0
    %197 = vmatpush1.msra.mxu0 0.0
    %198 = vmatprep.subr.mxu0 0.0
    %199 = vmatpush1.msra.mxu0 0.0
    %200 = vmatprep.mubr.f32.mxu0 0.0
    %201 = vmatmul.mubr.f32.gmra.mrb[0].mxu0 %v38
    %v202 = vpop.f32.mrb[0].mxu0
    %v203 = vadd.f32 0.0, %v202
    %v204 = vpop.f32.mrb[0].mxu0
    %v205 = vadd.f32 0.0, %v204
    %206 = vmatprep.mubr.f32.mxu0 0.0
    %207 = vmatmul.mubr.f32.gmra.mrb[0].mxu0 %v41
    %v208 = vpop.f32.mrb[0].mxu0
    %v209 = vadd.f32 0.0, %v208
    %v210 = vpop.f32.mrb[0].mxu0
    %v211 = vadd.f32 0.0, %v210
    %212 = vdwg.mxu0
    %v213 = vxor.u32 %v110, 2147483648
    %v214 = vxor.u32 %v112, 2147483648
    %v215 = vxor.u32 %v116, 2147483648
    %v216 = vxor.u32 %v118, 2147483648
    %v217 = vmul.f32 %v213, 1.442695
    %v218 = vpow.pop %v217
    %v219 = vmul.f32 %v214, 1.442695
    %v220 = vpow.pop %v219
    %v221 = vmul.f32 %v215, 1.442695
    %v222 = vpow.pop %v221
    %v223 = vmul.f32 %v216, 1.442695
    %v224 = vpow.pop %v223
    %v225 = vadd.f32 %v218, 1.0
    %v226 = vadd.f32 %v220, 1.0
    %v227 = vadd.f32 %v222, 1.0
    %v228 = vadd.f32 %v224, 1.0
    %v229 = vrcp.pop %v225
    %v230 = vmul.f32 1.0, %v229
    %v231 = vrcp.pop %v226
    %v232 = vmul.f32 1.0, %v231
    %v233 = vrcp.pop %v227
    %v234 = vmul.f32 1.0, %v233
    %v235 = vrcp.pop %v228
    %v236 = vmul.f32 1.0, %v235
    %v237 = vmul.f32 %v110, %v230
    %v238 = vmul.f32 %v112, %v232
    %v239 = vmul.f32 %v116, %v234
    %v240 = vmul.f32 %v118, %v236
    %v241 = vmul.f32 %v237, %v203
    %v242 = vmul.f32 %v238, %v205
    %v243 = vmul.f32 %v239, %v209
    %v244 = vmul.f32 %v240, %v211
    %v245 = vld [vmem:[%s3] sm:$0xff]
    %v246 = vld [vmem:[%s3 + $0x8] sm:$0xff]
    %v247 = vld [vmem:[%s3 + $0x10] sm:$0xff]
    %v248 = vld [vmem:[%s3 + $0x18] sm:$0xff]
    %v249 = vld [vmem:[%s3 + $0x20] sm:$0xff]
    %v250 = vld [vmem:[%s3 + $0x28] sm:$0xff]
    %v251 = vld [vmem:[%s3 + $0x30] sm:$0xff]
    %v252 = vld [vmem:[%s3 + $0x38] sm:$0xff]
    %v253 = vld [vmem:[%s3 + $0x40] sm:$0xff]
    %v254 = vld [vmem:[%s3 + $0x48] sm:$0xff]
    %v255 = vld [vmem:[%s3 + $0x50] sm:$0xff]
    %v256 = vld [vmem:[%s3 + $0x58] sm:$0xff]
    %v257 = vld [vmem:[%s3 + $0x60] sm:$0xff]
    %v258 = vld [vmem:[%s3 + $0x68] sm:$0xff]
    %v259 = vld [vmem:[%s3 + $0x70] sm:$0xff]
    %v260 = vld [vmem:[%s3 + $0x78] sm:$0xff]
    %v261 = vld [vmem:[%s3 + $0x80] sm:$0xff]
    %v262 = vld [vmem:[%s3 + $0x88] sm:$0xff]
    %v263 = vld [vmem:[%s3 + $0x90] sm:$0xff]
    %v264 = vld [vmem:[%s3 + $0x98] sm:$0xff]
    %v265 = vld [vmem:[%s3 + $0xa0] sm:$0xff]
    %v266 = vld [vmem:[%s3 + $0xa8] sm:$0xff]
    %v267 = vld [vmem:[%s3 + $0xb0] sm:$0xff]
    %v268 = vld [vmem:[%s3 + $0xb8] sm:$0xff]
    %v269 = vld [vmem:[%s3 + $0xc0] sm:$0xff]
    %v270 = vld [vmem:[%s3 + $0xc8] sm:$0xff]
    %v271 = vld [vmem:[%s3 + $0xd0] sm:$0xff]
    %v272 = vld [vmem:[%s3 + $0xd8] sm:$0xff]
    %v273 = vld [vmem:[%s3 + $0xe0] sm:$0xff]
    %v274 = vld [vmem:[%s3 + $0xe8] sm:$0xff]
    %v275 = vld [vmem:[%s3 + $0xf0] sm:$0xff]
    %v276 = vld [vmem:[%s3 + $0xf8] sm:$0xff]
    %277 = vmatprep.subr.mxu0 0.0
    %278 = vmatpush1.msra.mxu0 %v245
    %279 = vmatprep.subr.mxu0 0.0
    %280 = vmatpush1.msra.mxu0 %v246
    %281 = vmatprep.subr.mxu0 0.0
    %282 = vmatpush1.msra.mxu0 %v247
    %283 = vmatprep.subr.mxu0 0.0
    %284 = vmatpush1.msra.mxu0 %v248
    %285 = vmatprep.subr.mxu0 0.0
    %286 = vmatpush1.msra.mxu0 %v249
    %287 = vmatprep.subr.mxu0 0.0
    %288 = vmatpush1.msra.mxu0 %v250
    %289 = vmatprep.subr.mxu0 0.0
    %290 = vmatpush1.msra.mxu0 %v251
    %291 = vmatprep.subr.mxu0 0.0
    %292 = vmatpush1.msra.mxu0 %v252
    %293 = vmatprep.subr.mxu0 0.0
    %294 = vmatpush1.msra.mxu0 %v253
    %295 = vmatprep.subr.mxu0 0.0
    %296 = vmatpush1.msra.mxu0 %v254
    %297 = vmatprep.subr.mxu0 0.0
    %298 = vmatpush1.msra.mxu0 %v255
    %299 = vmatprep.subr.mxu0 0.0
    %300 = vmatpush1.msra.mxu0 %v256
    %301 = vmatprep.subr.mxu0 0.0
    %302 = vmatpush1.msra.mxu0 %v257
    %303 = vmatprep.subr.mxu0 0.0
    %304 = vmatpush1.msra.mxu0 %v258
    %305 = vmatprep.subr.mxu0 0.0
    %306 = vmatpush1.msra.mxu0 %v259
    %307 = vmatprep.subr.mxu0 0.0
    %308 = vmatpush1.msra.mxu0 %v260
    %309 = vmatprep.subr.mxu0 0.0
    %310 = vmatpush1.msra.mxu0 %v261
    %311 = vmatprep.subr.mxu0 0.0
    %312 = vmatpush1.msra.mxu0 %v262
    %313 = vmatprep.subr.mxu0 0.0
    %314 = vmatpush1.msra.mxu0 %v263
    %315 = vmatprep.subr.mxu0 0.0
    %316 = vmatpush1.msra.mxu0 %v264
    %317 = vmatprep.subr.mxu0 0.0
    %318 = vmatpush1.msra.mxu0 %v265
    %319 = vmatprep.subr.mxu0 0.0
    %320 = vmatpush1.msra.mxu0 %v266
    %321 = vmatprep.subr.mxu0 0.0
    %322 = vmatpush1.msra.mxu0 %v267
    %323 = vmatprep.subr.mxu0 0.0
    %324 = vmatpush1.msra.mxu0 %v268
    %325 = vmatprep.subr.mxu0 0.0
    %326 = vmatpush1.msra.mxu0 %v269
    %327 = vmatprep.subr.mxu0 0.0
    %328 = vmatpush1.msra.mxu0 %v270
    %329 = vmatprep.subr.mxu0 0.0
    %330 = vmatpush1.msra.mxu0 %v271
    %331 = vmatprep.subr.mxu0 0.0
    %332 = vmatpush1.msra.mxu0 %v272
    %333 = vmatprep.subr.mxu0 0.0
    %334 = vmatpush1.msra.mxu0 %v273
    %335 = vmatprep.subr.mxu0 0.0
    %336 = vmatpush1.msra.mxu0 %v274
    %337 = vmatprep.subr.mxu0 0.0
    %338 = vmatpush1.msra.mxu0 %v275
    %339 = vmatprep.subr.mxu0 0.0
    %340 = vmatpush1.msra.mxu0 %v276
    %341 = vmatprep.mubr.f32.mxu0 %v242
    %342 = vmatmul.mubr.f32.gmra.mrb[0].mxu0 %v241
    %v343 = vpop.f32.mrb[0].mxu0
    %v344 = vadd.f32 0.0, %v343
    %v345 = vpop.f32.mrb[0].mxu0
    %346 = vmatprep.mubr.f32.mxu0 %v244
    %347 = vmatmul.mubr.f32.gmra.mrb[0].mxu0 %v243
    %v348 = vpop.f32.mrb[0].mxu0
    %v349 = vadd.f32 0.0, %v348
    %v350 = vpop.f32.mrb[0].mxu0
    %351 = vdwg.mxu0
    %352 = vst.msk [vmem:[#allocation2] sm:$0xff] %vm36, %v344
    %353 = vst.msk [vmem:[#allocation2 + $0x8] sm:$0xff] %vm36, %v349
    // Predicated region
    $region18: #{expert_forward.1} parent=1 // pred_check
      _
    $region19: #{expert_forward.1} parent=1 // pred_check_branch
      %355 = sbr.rel (0) target = $region21
    $region20: #{expert_forward.1} parent=1 // pred_region
      %s357 = ssub.s32 256, 256
      %358 = vsyncadd [#allocation3], %s357
      %s359 = sshll.u32 [#allocation2], 4
      %s360 = int_to_ptr.vmem [resolvable:$true] %s359
      %365 = dma.vmem_to_hbm [thread:$0]  %s360, 256, %s4, [#allocation3], 128, 128, 8
    $region21: #{expert_forward.1} parent=1 // pred_fallthru
      _
    // Predicated region
    $region22: #{expert_forward.1} parent=1 // pred_check
      _
    $region23: #{expert_forward.1} parent=1 // pred_check_branch
      %367 = sbr.rel (0) target = $region25
    $region24: #{expert_forward.1} parent=1 // pred_region
      %368 = dma.done [#allocation3], 256
    $region25: #{expert_forward.1} parent=1 // pred_fallthru
      _
    %369 = vsyncpa [#allocation3], 1

</llo_original>
